<compile_context>
chip_gen: v7x
topology: tpu7x:2x2x1
jax: 0.10.0
libtpu: 0.0.40
codegen_flags: <defaults>
</compile_context>

<pallas_src>
import functools

import jax
import jax.numpy as jnp
from jax import lax
from jax.experimental import pallas as pl
from jax.experimental.pallas import tpu as pltpu


def _tpu_budgets():
    """Return (per-input block byte budget, scoped VMEM limit) for this chip."""
    cap = None
    try:
        info = pltpu.get_tpu_info()
        cap = getattr(info, "vmem_capacity_bytes", None)
    except Exception:
        cap = None
    if cap is None:
        cap = 64 * 1024 * 1024                      # conservative: v7x per-TC VMEM
    if cap >= 96 * 1024 * 1024:                     # v5e / v6e: 128 MiB VMEM
        return 16 * 1024 * 1024, 64 * 1024 * 1024
    return 8 * 1024 * 1024, 36 * 1024 * 1024        # v7x: 64 MiB physical


def _pick_tile(n, max_tile, align):
    """Largest tile <= max_tile dividing n; a multiple of `align` unless full extent."""
    if n <= max_tile:
        return n
    t = (max_tile // align) * align
    while t >= align:
        if n % t == 0:
            return t
        t -= align
    return n  # fallback: full extent (always layout-legal)


# ---------------------------------------------------------------------------
# Kernels
# ---------------------------------------------------------------------------

def mean_pool_kernel(hidden_ref, mask_ref, out_ref, sum_sc, cnt_sc, *, normalize):
    """Masked mean pooling over the sequence axis (+ optional L2 norm).

    Grid = (batch tiles, sequence tiles); the output block is resident across
    the sequence axis and accumulated in VMEM scratch (init / finalize via
    pl.when).
    """
    s = pl.program_id(1)

    @pl.when(s == 0)
    def _():
        sum_sc[...] = jnp.zeros_like(sum_sc)
        cnt_sc[...] = jnp.zeros_like(cnt_sc)

    # Keep the HBM dtype (bf16 stays bf16) end-to-end; the masked sequence sum
    # runs on the MXU as a batched (1 x TS) @ (TS x H) matmul with f32
    # accumulation, so there is no full-block f32 cast and no VALU mul pass.
    h = hidden_ref[...]                                   # (TB, TS, H)
    m = mask_ref[...]                                     # (TB, 1, TS) - lane-dense, no relayout
    sum_sc[...] += jnp.einsum("bqs,bsh->bqh", m.astype(h.dtype), h,
                              preferred_element_type=jnp.float32)      # (TB, 1, H)
    cnt_sc[...] += jnp.sum(m.astype(jnp.float32), axis=2, keepdims=True)  # (TB, 1, 1)

    @pl.when(s == pl.num_programs(1) - 1)
    def _():
        denom = jnp.maximum(cnt_sc[...], 1e-9)            # torch.clamp(min=1e-9)
        reps = sum_sc[...] / denom                        # exact divide (torch parity)
        if normalize:
            norm = jnp.sqrt(jnp.sum(reps * reps, axis=-1, keepdims=True))
            reps = reps / jnp.maximum(norm, 1e-12)        # F.normalize(p=2, eps=1e-12)
        out_ref[...] = reps.astype(out_ref.dtype)


def pooler_kernel(x_ref, w1_ref, b1_ref, w2_ref, b2_ref, out_ref, *, normalize):
    """LinearPooler: Linear -> ReLU -> Linear (weights stored (in, out)), + opt. L2 norm."""
    x = x_ref[...]                                                        # (TB, H_in)
    h = jnp.dot(x, w1_ref[...], preferred_element_type=jnp.float32) + b1_ref[...]
    h = jnp.maximum(h, 0.0)                                               # ReLU
    y = jnp.dot(h.astype(w2_ref.dtype), w2_ref[...],
                preferred_element_type=jnp.float32) + b2_ref[...]
    if normalize:
        norm = jnp.sqrt(jnp.sum(y * y, axis=-1, keepdims=True))
        y = y / jnp.maximum(norm, 1e-12)
    out_ref[...] = y.astype(out_ref.dtype)


def scores_loss_kernel(q_ref, p_ref, scores_ref, loss_ref, *, l2_dist, target_mult,
                       n_valid_q, tq):
    """Similarity scores + per-row CE terms, tiled over query rows.

    Grid = (Bq tiles,).  Passages stay resident across all query tiles; each
    tile writes its (TQ, Bp) scores block plus (TQ, 1) per-row `lse - picked`
    terms (zeroed for padded rows) which are averaged outside the kernel.
    """
    q = q_ref[...]                                        # (TQ, H)
    p = p_ref[...]                                        # (Bp, H)

    # MXU matmul contracting q axis 1 vs p axis 1 -- no explicit p.T transpose.
    qp = lax.dot_general(q, p, dimension_numbers=(((1,), (1,)), ((), ())),
                         preferred_element_type=jnp.float32)            # (TQ, Bp)
    if l2_dist:
        # -||q - p||^2 = 2*q.p - ||q||^2 - ||p||^2 : no (Bq, Bp, H) intermediate,
        # bulk of the work stays on the MXU.
        qf = q.astype(jnp.float32)
        pf = p.astype(jnp.float32)
        q_sq = jnp.sum(qf * qf, axis=-1, keepdims=True)                 # (TQ, 1)
        p_sq_row = lax.dot_general(                                     # (1, Bp), lane-dense
            jnp.ones((1, pf.shape[1]), jnp.float32), pf * pf,
            dimension_numbers=(((1,), (1,)), ((), ())),
            preferred_element_type=jnp.float32)
        scores = 2.0 * qp - q_sq - p_sq_row
    else:
        scores = qp
    scores_ref[...] = scores

    tq_b, bp = scores.shape
    base = pl.program_id(0) * tq
    row_g = base + lax.broadcasted_iota(jnp.int32, (tq_b, bp), 0)       # global row index
    col = lax.broadcasted_iota(jnp.int32, (tq_b, bp), 1)
    onehot = col == row_g * target_mult                   # target[i] = i * target_mult

    m = jnp.max(scores, axis=-1, keepdims=True)
    lse = m + jnp.log(jnp.sum(jnp.exp(scores - m), axis=-1, keepdims=True))   # (TQ, 1)
    picked = jnp.sum(jnp.where(onehot, scores, 0.0), axis=-1, keepdims=True)  # (TQ, 1)
    valid = (base + lax.broadcasted_iota(jnp.int32, (tq_b, 1), 0)) < n_valid_q
    loss_ref[...] = jnp.where(valid, lse - picked, 0.0)


# ---------------------------------------------------------------------------
# Wrappers (pallas_call plumbing)
# ---------------------------------------------------------------------------

def mean_pooling_pallas(hidden, mask, *, normalize):
    B, S, H = hidden.shape
    block_budget, vmem_limit = _tpu_budgets()
    itemsize = jnp.dtype(hidden.dtype).itemsize

    # Batch tile: multiple of 8 (sublane) unless B is small enough for full extent.
    if B <= 8:
        TB = B
    else:
        TB = 8
        pad_b = (-B) % TB
        if pad_b:  # padded rows carry mask=0 and are sliced off the output
            hidden = jnp.pad(hidden, ((0, pad_b), (0, 0), (0, 0)))
            mask = jnp.pad(mask, ((0, pad_b), (0, 0)))
    Bt = hidden.shape[0]

    # Sequence tile: full extent if it fits the block budget, else a multiple of
    # 128 with zero-padding (padded positions carry mask=0 -> ignored by pooling).
    if TB * S * H * itemsize <= block_budget:
        TS = S
    else:
        max_ts = max(128, block_budget // max(1, TB * H * itemsize))
        TS = max(128, (max_ts // 128) * 128)
        pad_s = (-S) % TS
        if pad_s:
            hidden = jnp.pad(hidden, ((0, 0), (0, pad_s), (0, 0)))
            mask = jnp.pad(mask, ((0, 0), (0, pad_s)))
    Sp = hidden.shape[1]

    # Pre-shape the mask to (B, 1, S): its block matches the hidden block's
    # lane layout, so no lane->sublane relayout happens inside the kernel.
    mask3 = mask.reshape(Bt, 1, Sp)

    out = pl.pallas_call(
        functools.partial(mean_pool_kernel, normalize=normalize),
        out_shape=jax.ShapeDtypeStruct((Bt, 1, H), jnp.float32),
        grid=(Bt // TB, Sp // TS),
        in_specs=[
            pl.BlockSpec((TB, TS, H), lambda b, s: (b, s, 0)),
            pl.BlockSpec((TB, 1, TS), lambda b, s: (b, 0, s)),
        ],
        out_specs=pl.BlockSpec((TB, 1, H), lambda b, s: (b, 0, 0)),
        scratch_shapes=[
            pltpu.VMEM((TB, 1, H), jnp.float32),
            pltpu.VMEM((TB, 1, 1), jnp.float32),
        ],
        compiler_params=pltpu.CompilerParams(
            dimension_semantics=("parallel", "arbitrary"),
            vmem_limit_bytes=vmem_limit,
        ),
    )(hidden, mask3)
    return out.reshape(Bt, H)[:B]


def linear_pooler_pallas(x, w1, b1, w2, b2, *, normalize):
    B, Hin = x.shape
    Hout = w2.shape[1]
    _, vmem_limit = _tpu_budgets()
    TB = _pick_tile(B, 256, 8)
    return pl.pallas_call(
        functools.partial(pooler_kernel, normalize=normalize),
        out_shape=jax.ShapeDtypeStruct((B, Hout), jnp.float32),
        grid=(B // TB,),
        in_specs=[
            pl.BlockSpec((TB, Hin), lambda b: (b, 0)),
            pl.BlockSpec(w1.shape, lambda b: (0, 0)),
            pl.BlockSpec(b1.shape, lambda b: (0, 0)),
            pl.BlockSpec(w2.shape, lambda b: (0, 0)),
            pl.BlockSpec(b2.shape, lambda b: (0, 0)),
        ],
        out_specs=pl.BlockSpec((TB, Hout), lambda b: (b, 0)),
        compiler_params=pltpu.CompilerParams(
            dimension_semantics=("parallel",),
            vmem_limit_bytes=vmem_limit,
        ),
    )(x, w1, b1, w2, b2)


def scores_and_loss_pallas(q_reps, p_reps, *, l2_dist, target_mult):
    Bq, H = q_reps.shape
    Bp, _ = p_reps.shape
    # Every CE target index must hit a real passage column.
    assert (Bq - 1) * target_mult < Bp, "target index (arange * (1+hn_num)) exceeds Bp"
    block_budget, vmem_limit = _tpu_budgets()

    # TODO(synk): p_reps (Bp, H) stays fully resident across query tiles; if
    # Bp*H itself outgrows the VMEM budget a streaming/online-LSE variant over
    # Bp tiles would be needed.

    if Bq <= 256:
        TQ, Bq_pad, qr = Bq, Bq, q_reps
    else:
        # Keep the f32 (TQ, Bp) scores block within ~half the per-block budget.
        max_tq = max(128, (block_budget // 2) // max(1, Bp * 4))
        TQ = max(128, min(256, (max_tq // 128) * 128))
        Bq_pad = ((Bq + TQ - 1) // TQ) * TQ
        qr = q_reps if Bq_pad == Bq else jnp.pad(q_reps, ((0, Bq_pad - Bq), (0, 0)))

    scores, loss_rows = pl.pallas_call(
        functools.partial(scores_loss_kernel, l2_dist=l2_dist,
                          target_mult=target_mult, n_valid_q=Bq, tq=TQ),
        out_shape=(
            jax.ShapeDtypeStruct((Bq_pad, Bp), jnp.float32),
            jax.ShapeDtypeStruct((Bq_pad, 1), jnp.float32),
        ),
        grid=(Bq_pad // TQ,),
        in_specs=[
            pl.BlockSpec((TQ, H), lambda i: (i, 0)),
            pl.BlockSpec((Bp, H), lambda i: (0, 0)),
        ],
        out_specs=(
            pl.BlockSpec((TQ, Bp), lambda i: (i, 0)),
            pl.BlockSpec((TQ, 1), lambda i: (i, 0)),
        ),
        compiler_params=pltpu.CompilerParams(
            dimension_semantics=("parallel",),
            vmem_limit_bytes=vmem_limit,
        ),
    )(qr, p_reps)
    loss = jnp.sum(loss_rows) / Bq      # CrossEntropyLoss(reduction='mean') over real rows
    return scores[:Bq], loss


# ---------------------------------------------------------------------------
# DenseModel / DenseModelForInference (JAX/Pallas port)
# ---------------------------------------------------------------------------

class DenseModelPallas:
    """OpenLP DenseModel (training parent), single device (negatives_x_device=False)."""

    # TODO(synk): the pretrained transformer `self.lm` and dist.all_gather
    # (dist_gather_tensor / negatives_x_device) have no clean Pallas equivalent;
    # the kernels consume `last_hidden_state` produced upstream.

    def __init__(self, hidden_dim=32, *, mean_pool=True, add_pooler=False,
                 embed_normalized=True, l2_dist=False, hn_num=0, rep_pos=0,
                 bf16_matmul=True, seed=0):
        self.hidden_dim = hidden_dim
        self.mean_pool = mean_pool
        self.add_pooler = add_pooler
        self.embed_normalized = embed_normalized
        self.l2_dist = l2_dist
        self.hn_num = hn_num
        self.rep_pos = rep_pos
        # bf16 operands hit the 256x256 MXU native rate on v6e/v7x (f32 accumulate);
        # set False for bit-level parity with the f32 torch reference.
        self.bf16_matmul = bf16_matmul
        self._mm_dtype = jnp.bfloat16 if bf16_matmul else jnp.float32

        if add_pooler:
            # LinearPooler: Linear(H, H) -> ReLU -> Linear(H, H), deterministic init.
            key = jax.random.PRNGKey(seed)
            k1, k2, k3, k4 = jax.random.split(key, 4)
            bound = 1.0 / float(hidden_dim) ** 0.5
            self.w1 = jax.random.uniform(k1, (hidden_dim, hidden_dim), jnp.float32,
                                         -bound, bound).astype(self._mm_dtype)
            self.b1 = jax.random.uniform(k2, (1, hidden_dim), jnp.float32, -bound, bound)
            self.w2 = jax.random.uniform(k3, (hidden_dim, hidden_dim), jnp.float32,
                                         -bound, bound).astype(self._mm_dtype)
            self.b2 = jax.random.uniform(k4, (1, hidden_dim), jnp.float32, -bound, bound)

    def encode(self, psg):
        if psg is None:
            return None, None
        # Keep the HBM-resident dtype (bf16/f32); kernels cast only where needed.
        p_hidden = psg["last_hidden_state"]              # (B, S, H)
        attention_mask = psg["attention_mask"]           # (B, S)
        if self.mean_pool:
            p_reps = mean_pooling_pallas(p_hidden, attention_mask,
                                         normalize=self.embed_normalized)
        else:
            cls = p_hidden[:, self.rep_pos, :]                           # (B, H)
            if self.add_pooler:
                x = cls.astype(self._mm_dtype)
                p_reps = linear_pooler_pallas(x, self.w1, self.b1, self.w2, self.b2,
                                              normalize=self.embed_normalized)
            elif self.embed_normalized:
                cls32 = cls.astype(jnp.float32)
                norm = jnp.sqrt(jnp.sum(cls32 * cls32, axis=-1, keepdims=True))
                p_reps = cls32 / jnp.maximum(norm, 1e-12)
            else:
                p_reps = cls.astype(jnp.float32)
        return p_hidden, p_reps

    def forward(self, query, keys):
        _, q_reps = self.encode(query)
        _, p_reps = self.encode(keys)
        if q_reps is None or p_reps is None:
            return {"q_reps": q_reps, "p_reps": p_reps}

        bq = q_reps.shape[0]
        bp = p_reps.shape[0]
        target_mult = (1 + self.hn_num) if bq != bp else 1

        # bf16 operands halve the reps DMA into the scores kernel and run the
        # MXU at full rate; the l2_dist branch keeps f32 to preserve the
        # 2*q.p - ||q||^2 - ||p||^2 cancellation accuracy.
        if self.bf16_matmul and not self.l2_dist:
            qs, ps = q_reps.astype(jnp.bfloat16), p_reps.astype(jnp.bfloat16)
        else:
            qs, ps = q_reps, p_reps

        scores, loss = scores_and_loss_pallas(qs, ps,
                                              l2_dist=self.l2_dist,
                                              target_mult=target_mult)
        target = jnp.arange(bq, dtype=jnp.int32) * target_mult
        return {"loss": loss, "scores": scores, "target": target,
                "q_reps": q_reps, "p_reps": p_reps}


class DenseModelForInferencePallas(DenseModelPallas):
    """Port of OpenLP DenseModelForInference.forward: encode both sides, no loss."""

    def forward(self, query=None, passage=None):
        _, q_reps = self.encode(query)
        _, p_reps = self.encode(passage)
        return {"q_reps": q_reps, "p_reps": p_reps}


# ---------------------------------------------------------------------------
# Demo
# ---------------------------------------------------------------------------

if __name__ == "__main__":
    B, S, H = 4, 8, 32  # batch, seq len, hidden dim

    key = jax.random.PRNGKey(0)
    kq, kp, kx = jax.random.split(key, 3)
    q_hidden = jax.random.normal(kq, (B, S, H), jnp.float32)
    p_hidden = jax.random.normal(kp, (B, S, H), jnp.float32)

    # deterministic ragged attention masks (at least one valid token per row)
    lengths = jnp.array([8, 5, 3, 6], dtype=jnp.int32)
    seq_pos = jnp.arange(S, dtype=jnp.int32)[None, :]
    attn_mask = (seq_pos < lengths[:, None]).astype(jnp.float32)

    query = {"last_hidden_state": q_hidden, "attention_mask": attn_mask}
    passage = {"last_hidden_state": p_hidden, "attention_mask": attn_mask}

    # 1) DenseModelForInference forward: mean pooling + L2-normalized reps.
    infer_mp = DenseModelForInferencePallas(hidden_dim=H, mean_pool=True,
                                            add_pooler=False, embed_normalized=True)
    out_inf = infer_mp.forward(query=query, passage=passage)
    jax.block_until_ready(out_inf["q_reps"])
    jax.block_until_ready(out_inf["p_reps"])

    # 2) DenseModelForInference forward: CLS token + LinearPooler path (bf16 MXU).
    infer_pl = DenseModelForInferencePallas(hidden_dim=H, mean_pool=False,
                                            add_pooler=True, embed_normalized=False)
    out_inf2 = infer_pl.forward(query=query, passage=passage)
    jax.block_until_ready(out_inf2["q_reps"])
    jax.block_until_ready(out_inf2["p_reps"])

    # 3) bf16 hidden states stay bf16 over the HBM->VMEM DMA and through the
    #    masked-sum MXU matmul (f32 accumulation).
    query_bf16 = {"last_hidden_state": q_hidden.astype(jnp.bfloat16),
                  "attention_mask": attn_mask}
    passage_bf16 = {"last_hidden_state": p_hidden.astype(jnp.bfloat16),
                    "attention_mask": attn_mask}
    out_bf16 = infer_mp.forward(query=query_bf16, passage=passage_bf16)
    jax.block_until_ready(out_bf16["q_reps"])

    # 4) Larger batch exercises batch tiling + padding (TB=8, pad 12 -> 16).
    B2 = 12
    x_hidden = jax.random.normal(kx, (B2, S, H), jnp.float32)
    mask2 = jnp.ones((B2, S), jnp.float32)
    big = {"last_hidden_state": x_hidden, "attention_mask": mask2}
    out_big = infer_mp.forward(query=big, passage=None)
    jax.block_until_ready(out_big["q_reps"])

    # 5) Training-parent DenseModel path: dot-product scores (bf16 MXU) + CE loss.
    train_dot = DenseModelPallas(hidden_dim=H, mean_pool=True, add_pooler=False,
                                 embed_normalized=True, l2_dist=False)
    out_dot = train_dot.forward(query, passage)
    jax.block_until_ready(out_dot["loss"])
    jax.block_until_ready(out_dot["scores"])

    # 6) Training-parent path with negative squared-L2 scores (f32, MXU form).
    train_l2 = DenseModelPallas(hidden_dim=H, mean_pool=True, add_pooler=False,
                                embed_normalized=False, l2_dist=True)
    out_l2 = train_l2.forward(query, passage)
    jax.block_until_ready(out_l2["loss"])
    jax.block_until_ready(out_l2["scores"])

    print("KERNEL_OK")
</pallas_src>

<mosaic_0001>
module attributes {stable_mosaic.version = 11 : i64} {
  func.func @mean_pool_kernel(%arg0: i32, %arg1: i32, %arg2: memref<4x8x32xf32, #tpu.memory_space<vmem>>, %arg3: memref<4x1x8xf32, #tpu.memory_space<vmem>>, %arg4: memref<4x1x32xf32, #tpu.memory_space<vmem>>, %arg5: memref<4x1x32xf32, #tpu.memory_space<vmem>>, %arg6: memref<4x1x1xf32, #tpu.memory_space<vmem>>) attributes {dimension_semantics = [#tpu.dimension_semantics<parallel>, #tpu.dimension_semantics<arbitrary>], iteration_bounds = array<i64: 1, 1>, scalar_prefetch = 0 : i64, scratch_operands = 2 : i64, tpu.core_type = #tpu.core_type<tc>, window_params = [{transform_indices = @transform_0, window_bounds = array<i64: 4, 8, 32>}, {transform_indices = @transform_1, window_bounds = array<i64: 4, 1, 8>}, {transform_indices = @transform_2, window_bounds = array<i64: 4, 1, 32>}]} {
    %c0_i32 = arith.constant 0 : i32
    %0 = arith.cmpi eq, %arg1, %c0_i32 : i32
    %1 = arith.extui %0 : i1 to i32
    %c0_i32_0 = arith.constant 0 : i32
    %2 = arith.cmpi ne, %1, %c0_i32_0 : i32
    scf.if %2 {
      %cst_21 = arith.constant 0.000000e+00 : f32
      %17 = vector.broadcast %cst_21 : f32 to vector<4x1x32xf32>
      %c0_22 = arith.constant 0 : index
      %c0_23 = arith.constant 0 : index
      %c0_24 = arith.constant 0 : index
      %18 = vector.load %arg5[%c0_22, %c0_23, %c0_24] : memref<4x1x32xf32, #tpu.memory_space<vmem>>, vector<4x1x32xf32>
      tpu.vector_store %arg5[%c0_22, %c0_23, %c0_24], %17 {strides = array<i32>} : memref<4x1x32xf32, #tpu.memory_space<vmem>>, vector<4x1x32xf32>,
      %cst_25 = arith.constant 0.000000e+00 : f32
      %19 = vector.broadcast %cst_25 : f32 to vector<4x1x1xf32>
      %c0_26 = arith.constant 0 : index
      %c0_27 = arith.constant 0 : index
      %c0_28 = arith.constant 0 : index
      %20 = vector.load %arg6[%c0_26, %c0_27, %c0_28] : memref<4x1x1xf32, #tpu.memory_space<vmem>>, vector<4x1x1xf32>
      tpu.vector_store %arg6[%c0_26, %c0_27, %c0_28], %19 {strides = array<i32>} : memref<4x1x1xf32, #tpu.memory_space<vmem>>, vector<4x1x1xf32>,
    } else {
    }
    %c0 = arith.constant 0 : index
    %c0_1 = arith.constant 0 : index
    %c0_2 = arith.constant 0 : index
    %3 = vector.load %arg2[%c0, %c0_1, %c0_2] : memref<4x8x32xf32, #tpu.memory_space<vmem>>, vector<4x8x32xf32>
    %c0_3 = arith.constant 0 : index
    %c0_4 = arith.constant 0 : index
    %c0_5 = arith.constant 0 : index
    %4 = vector.load %arg3[%c0_3, %c0_4, %c0_5] : memref<4x1x8xf32, #tpu.memory_space<vmem>>, vector<4x1x8xf32>
    %c0_6 = arith.constant 0 : index
    %c0_7 = arith.constant 0 : index
    %c0_8 = arith.constant 0 : index
    %5 = vector.load %arg5[%c0_6, %c0_7, %c0_8] : memref<4x1x32xf32, #tpu.memory_space<vmem>>, vector<4x1x32xf32>
    "tpu.trace_start"() <{level = 10 : i32, message = "bqs,bsh->bqh"}> : () -> ()
    %cst = arith.constant dense<0.000000e+00> : vector<4x1x32xf32>
    %6 = tpu.matmul %4, %3, %cst {dimension_numbers = #tpu.dot_dimension_numbers<[2], [1], [1], [2], [0, 0, 0, 1, 1, 2], [0], [0]>} : vector<4x1x8xf32>, vector<4x8x32xf32>, vector<4x1x32xf32> -> vector<4x1x32xf32>
    "tpu.trace_stop"() : () -> ()
    %7 = arith.addf %5, %6 : vector<4x1x32xf32>
    %c0_9 = arith.constant 0 : index
    %c0_10 = arith.constant 0 : index
    %c0_11 = arith.constant 0 : index
    %8 = vector.load %arg5[%c0_9, %c0_10, %c0_11] : memref<4x1x32xf32, #tpu.memory_space<vmem>>, vector<4x1x32xf32>
    tpu.vector_store %arg5[%c0_9, %c0_10, %c0_11], %7 {strides = array<i32>} : memref<4x1x32xf32, #tpu.memory_space<vmem>>, vector<4x1x32xf32>,
    %c0_12 = arith.constant 0 : index
    %c0_13 = arith.constant 0 : index
    %c0_14 = arith.constant 0 : index
    %9 = vector.load %arg6[%c0_12, %c0_13, %c0_14] : memref<4x1x1xf32, #tpu.memory_space<vmem>>, vector<4x1x1xf32>
    %cst_15 = arith.constant dense<0.000000e+00> : vector<4x1xf32>
    %10 = vector.multi_reduction <add>, %4, %cst_15 [2] : vector<4x1x8xf32> to vector<4x1xf32>
    %11 = vector.shape_cast %10 : vector<4x1xf32> to vector<4x1x1xf32>
    %12 = arith.addf %9, %11 : vector<4x1x1xf32>
    %c0_16 = arith.constant 0 : index
    %c0_17 = arith.constant 0 : index
    %c0_18 = arith.constant 0 : index
    %13 = vector.load %arg6[%c0_16, %c0_17, %c0_18] : memref<4x1x1xf32, #tpu.memory_space<vmem>>, vector<4x1x1xf32>
    tpu.vector_store %arg6[%c0_16, %c0_17, %c0_18], %12 {strides = array<i32>} : memref<4x1x1xf32, #tpu.memory_space<vmem>>, vector<4x1x1xf32>,
    %c0_i32_19 = arith.constant 0 : i32
    %14 = arith.cmpi eq, %arg1, %c0_i32_19 : i32
    %15 = arith.extui %14 : i1 to i32
    %c0_i32_20 = arith.constant 0 : i32
    %16 = arith.cmpi ne, %15, %c0_i32_20 : i32
    scf.if %16 {
      %c0_21 = arith.constant 0 : index
      %c0_22 = arith.constant 0 : index
      %c0_23 = arith.constant 0 : index
      %17 = vector.load %arg6[%c0_21, %c0_22, %c0_23] : memref<4x1x1xf32, #tpu.memory_space<vmem>>, vector<4x1x1xf32>
      %cst_24 = arith.constant 9.99999971E-10 : f32
      %18 = vector.broadcast %cst_24 : f32 to vector<4x1x1xf32>
      %19 = arith.maximumf %17, %18 : vector<4x1x1xf32>
      %c0_25 = arith.constant 0 : index
      %c0_26 = arith.constant 0 : index
      %c0_27 = arith.constant 0 : index
      %20 = vector.load %arg5[%c0_25, %c0_26, %c0_27] : memref<4x1x32xf32, #tpu.memory_space<vmem>>, vector<4x1x32xf32>
      %21 = vector.broadcast %19 : vector<4x1x1xf32> to vector<4x1x32xf32>
      %22 = arith.divf %20, %21 : vector<4x1x32xf32>
      %23 = arith.mulf %22, %22 : vector<4x1x32xf32>
      %cst_28 = arith.constant dense<0.000000e+00> : vector<4x1xf32>
      %24 = vector.multi_reduction <add>, %23, %cst_28 [2] : vector<4x1x32xf32> to vector<4x1xf32>
      %25 = vector.shape_cast %24 : vector<4x1xf32> to vector<4x1x1xf32>
      %26 = math.sqrt %25 : vector<4x1x1xf32>
      %cst_29 = arith.constant 9.99999996E-13 : f32
      %27 = vector.broadcast %cst_29 : f32 to vector<4x1x1xf32>
      %28 = arith.maximumf %26, %27 : vector<4x1x1xf32>
      %29 = vector.broadcast %28 : vector<4x1x1xf32> to vector<4x1x32xf32>
      %30 = arith.divf %22, %29 : vector<4x1x32xf32>
      %c0_30 = arith.constant 0 : index
      %c0_31 = arith.constant 0 : index
      %c0_32 = arith.constant 0 : index
      %31 = vector.load %arg4[%c0_30, %c0_31, %c0_32] : memref<4x1x32xf32, #tpu.memory_space<vmem>>, vector<4x1x32xf32>
      tpu.vector_store %arg4[%c0_30, %c0_31, %c0_32], %30 {strides = array<i32>} : memref<4x1x32xf32, #tpu.memory_space<vmem>>, vector<4x1x32xf32>,
    } else {
    }
    return
  }
  func.func @transform_0(%arg0: i32, %arg1: i32) -> (i32, i32, i32) {
    %c0_i32 = arith.constant 0 : i32
    %c0_i32_0 = arith.constant 0 : i32
    return %arg0, %arg1, %c0_i32 : i32, i32, i32
  }
  func.func @transform_1(%arg0: i32, %arg1: i32) -> (i32, i32, i32) {
    %c0_i32 = arith.constant 0 : i32
    %c0_i32_0 = arith.constant 0 : i32
    return %arg0, %c0_i32, %arg1 : i32, i32, i32
  }
  func.func @transform_2(%arg0: i32, %arg1: i32) -> (i32, i32, i32) {
    %c0_i32 = arith.constant 0 : i32
    %c0_i32_0 = arith.constant 0 : i32
    %c0_i32_1 = arith.constant 0 : i32
    return %arg0, %c0_i32, %c0_i32_0 : i32, i32, i32
  }
}

</mosaic_0001>

<llo_original>
// kernel: tpu_custom_call.1
$region0: #{tpu_custom_call.1}
  #allocation0 [shape = 'u32[]', space=smem, size = 0x4, offset = 0x4, fixed_abs, tag = 'smem constant byte address 0x4 - core index']
  #allocation1 [shape = 'u32[144,128]{1,0:T(1,128)}', space=vmem, size = 0x12000, scoped, tag = 'internal scratch']
  #allocation2 [shape = 'f32[4,1,32]{2,1,0:T(1,128)}', space=vmem, size = 0x800, scoped, tag = 'scratch operand']
  #allocation3 [shape = 'f32[4,1,1]{2,1,0:T(1,128)}', space=vmem, size = 0x800, scoped, tag = 'scratch operand']
  %s0 = inlined_call_operand.hbm [shape: f32[4,8,32], index: 0, kind: input, shape index: {}]
  %s1 = inlined_call_operand.hbm [shape: f32[4,1,8], index: 1, kind: input, shape index: {}]
  %s2 = inlined_call_operand.hbm [shape: f32[4,1,32], index: 2, kind: output, shape index: {}]
  %s3 = sld [smem:[#allocation0]]
  $region34: #{tpu_custom_call.1} parent=0
    _
  %s5 = ssub.s32 1, %s3
  %s6 = scalar_select 0, %s5, %s3
  $region1: #{tpu_custom_call.1} parent=0
    #allocation4 [shape = 'u8[16384]{0}', space=vmem, size = 0x4000, scoped, tag = 'input window, operand 0, single buffered']
    #allocation5 [shape = 's32[1]{0}', space=sflag, size = 0x4, scoped, tag = 'scoped memory for tpu_custom_call.1']
    #allocation6 [shape = 's32[1]{0}', space=sflag, size = 0x4, scoped, tag = 'scoped memory for tpu_custom_call.1']
    #allocation7 [shape = 'u8[2048]{0}', space=vmem, size = 0x800, scoped, tag = 'input window, operand 1, single buffered']
    #allocation8 [shape = 's32[1]{0}', space=sflag, size = 0x4, scoped, tag = 'scoped memory for tpu_custom_call.1']
    #allocation9 [shape = 'u8[2048]{0}', space=vmem, size = 0x800, scoped, tag = 'output window, operand 0, single buffered']
    %7 = vsyncpa [#allocation5], 0
    %8 = vsyncpa [#allocation8], 0
    %9 = vsyncpa [#allocation6], 0
    // Predicated region
    $region2: #{tpu_custom_call.1} parent=1 // pred_check
      _
    $region3: #{tpu_custom_call.1} parent=1 // pred_check_branch
      %11 = sbr.rel (0) target = $region5
    $region4: #{tpu_custom_call.1} parent=1 // pred_region
      %s13 = ssub.s32 512, 512
      %14 = vsyncadd [#allocation5], %s13
      %s15 = sshll.u32 [#allocation4], 4
      %s16 = int_to_ptr.vmem [resolvable:$true] %s15
      %21 = dma.hbm_to_vmem [thread:$0]  %s0, 512, %s16, [#allocation5], 128, 128, 8
    $region5: #{tpu_custom_call.1} parent=1 // pred_fallthru
      _
    // Predicated region
    $region6: #{tpu_custom_call.1} parent=1 // pred_check
      _
    $region7: #{tpu_custom_call.1} parent=1 // pred_check_branch
      %23 = sbr.rel (0) target = $region9
    $region8: #{tpu_custom_call.1} parent=1 // pred_region
      %s25 = ssub.s32 64, 64
      %26 = vsyncadd [#allocation8], %s25
      %s27 = sshll.u32 [#allocation7], 4
      %s28 = int_to_ptr.vmem [resolvable:$true] %s27
      %33 = dma.hbm_to_vmem [thread:$0]  %s1, 64, %s28, [#allocation8], 16, 16, 1
    $region9: #{tpu_custom_call.1} parent=1 // pred_fallthru
      _
    // Predicated region
    $region10: #{tpu_custom_call.1} parent=1 // pred_check
      _
    $region11: #{tpu_custom_call.1} parent=1 // pred_check_branch
      %35 = sbr.rel (0) target = $region13
    $region12: #{tpu_custom_call.1} parent=1 // pred_region
      %36 = dma.done [#allocation5], 512
    $region13: #{tpu_custom_call.1} parent=1 // pred_fallthru
      _
    // Predicated region
    $region14: #{tpu_custom_call.1} parent=1 // pred_check
      _
    $region15: #{tpu_custom_call.1} parent=1 // pred_check_branch
      %38 = sbr.rel (0) target = $region17
    $region16: #{tpu_custom_call.1} parent=1 // pred_region
      %39 = dma.done [#allocation8], 64
    $region17: #{tpu_custom_call.1} parent=1 // pred_fallthru
      _
    %p40 = scmp.eq.s32.totalorder 0, 0
    // Predicated region
    $region18: #{tpu_custom_call.1} parent=1 // pred_check
      %p41 = pneg %p40
    $region19: #{tpu_custom_call.1} parent=1 // pred_check_branch
      %43 = sbr.rel (%p41) target = $region21
    $region20: #{tpu_custom_call.1} parent=1 // pred_region
      %vm44 = vcmask 253952
      %45 = vst.msk [vmem:[#allocation2] sm:$0x1] %vm44, 0.0
      %46 = vst.msk [vmem:[#allocation2 + $0x1] sm:$0x1] %vm44, 0.0
      %47 = vst.msk [vmem:[#allocation2 + $0x2] sm:$0x1] %vm44, 0.0
      %48 = vst.msk [vmem:[#allocation2 + $0x3] sm:$0x1] %vm44, 0.0
      %vm49 = vcmask 0
      %50 = vst.msk [vmem:[#allocation3] sm:$0x1] %vm49, 0.0
      %51 = vst.msk [vmem:[#allocation3 + $0x1] sm:$0x1] %vm49, 0.0
      %52 = vst.msk [vmem:[#allocation3 + $0x2] sm:$0x1] %vm49, 0.0
      %53 = vst.msk [vmem:[#allocation3 + $0x3] sm:$0x1] %vm49, 0.0
    $region21: #{tpu_custom_call.1} parent=1 // pred_fallthru
      _
    %v54 = vld [vmem:[#allocation4] sm:$0xff]
    %v55 = vld [vmem:[#allocation4 + $0x8] sm:$0xff]
    %v56 = vld [vmem:[#allocation4 + $0x10] sm:$0xff]
    %v57 = vld [vmem:[#allocation4 + $0x18] sm:$0xff]
    %v58 = vld [vmem:[#allocation7] sm:$0x1]
    %v59 = vld [vmem:[#allocation7 + $0x1] sm:$0x1]
    %v60 = vld [vmem:[#allocation7 + $0x2] sm:$0x1]
    %v61 = vld [vmem:[#allocation7 + $0x3] sm:$0x1]
    %v62 = vld [vmem:[#allocation2] sm:$0x1]
    %v63 = vld [vmem:[#allocation2 + $0x1] sm:$0x1]
    %v64 = vld [vmem:[#allocation2 + $0x2] sm:$0x1]
    %v65 = vld [vmem:[#allocation2 + $0x3] sm:$0x1]
    %vm66 = vcmask 64512
    %v68 = vsel %vm66, %v58, 0
    %70 = vmatprep.subr.mxu0 0.0
    %71 = vmatpush1.msra.mxu0 %v54
    %72 = vmatprep.subr.mxu0 0.0
    %73 = vmatpush1.msra.mxu0 0.0
    %74 = vmatprep.subr.mxu0 0.0
    %75 = vmatpush1.msra.mxu0 0.0
    %76 = vmatprep.subr.mxu0 0.0
    %77 = vmatpush1.msra.mxu0 0.0
    %78 = vmatprep.subr.mxu0 0.0
    %79 = vmatpush1.msra.mxu0 0.0
    %80 = vmatprep.subr.mxu0 0.0
    %81 = vmatpush1.msra.mxu0 0.0
    %82 = vmatprep.subr.mxu0 0.0
    %83 = vmatpush1.msra.mxu0 0.0
    %84 = vmatprep.subr.mxu0 0.0
    %85 = vmatpush1.msra.mxu0 0.0
    %86 = vmatprep.subr.mxu0 0.0
    %87 = vmatpush1.msra.mxu0 0.0
    %88 = vmatprep.subr.mxu0 0.0
    %89 = vmatpush1.msra.mxu0 0.0
    %90 = vmatprep.subr.mxu0 0.0
    %91 = vmatpush1.msra.mxu0 0.0
    %92 = vmatprep.subr.mxu0 0.0
    %93 = vmatpush1.msra.mxu0 0.0
    %94 = vmatprep.subr.mxu0 0.0
    %95 = vmatpush1.msra.mxu0 0.0
    %96 = vmatprep.subr.mxu0 0.0
    %97 = vmatpush1.msra.mxu0 0.0
    %98 = vmatprep.subr.mxu0 0.0
    %99 = vmatpush1.msra.mxu0 0.0
    %100 = vmatprep.subr.mxu0 0.0
    %101 = vmatpush1.msra.mxu0 0.0
    %102 = vmatprep.subr.mxu0 0.0
    %103 = vmatpush1.msra.mxu0 0.0
    %104 = vmatprep.subr.mxu0 0.0
    %105 = vmatpush1.msra.mxu0 0.0
    %106 = vmatprep.subr.mxu0 0.0
    %107 = vmatpush1.msra.mxu0 0.0
    %108 = vmatprep.subr.mxu0 0.0
    %109 = vmatpush1.msra.mxu0 0.0
    %110 = vmatprep.subr.mxu0 0.0
    %111 = vmatpush1.msra.mxu0 0.0
    %112 = vmatprep.subr.mxu0 0.0
    %113 = vmatpush1.msra.mxu0 0.0
    %114 = vmatprep.subr.mxu0 0.0
    %115 = vmatpush1.msra.mxu0 0.0
    %116 = vmatprep.subr.mxu0 0.0
    %117 = vmatpush1.msra.mxu0 0.0
    %118 = vmatprep.subr.mxu0 0.0
    %119 = vmatpush1.msra.mxu0 0.0
    %120 = vmatprep.subr.mxu0 0.0
    %121 = vmatpush1.msra.mxu0 0.0
    %122 = vmatprep.subr.mxu0 0.0
    %123 = vmatpush1.msra.mxu0 0.0
    %124 = vmatprep.subr.mxu0 0.0
    %125 = vmatpush1.msra.mxu0 0.0
    %126 = vmatprep.subr.mxu0 0.0
    %127 = vmatpush1.msra.mxu0 0.0
    %128 = vmatprep.subr.mxu0 0.0
    %129 = vmatpush1.msra.mxu0 0.0
    %130 = vmatprep.subr.mxu0 0.0
    %131 = vmatpush1.msra.mxu0 0.0
    %132 = vmatprep.subr.mxu0 0.0
    %133 = vmatpush1.msra.mxu0 0.0
    %134 = vmatprep.mubr.f32.mxu0 0.0
    %135 = vmatmul.mubr.f32.gmra.mrb[0].mxu0 %v68
    %v136 = vpop.f32.mrb[0].mxu0
    %v137 = vadd.f32 0.0, %v136
    %v138 = vpop.f32.mrb[0].mxu0
    %139 = vdwg.mxu0
    %v141 = vsel %vm66, %v59, 0
    %143 = vmatprep.subr.mxu0 0.0
    %144 = vmatpush1.msra.mxu0 %v55
    %145 = vmatprep.subr.mxu0 0.0
    %146 = vmatpush1.msra.mxu0 0.0
    %147 = vmatprep.subr.mxu0 0.0
    %148 = vmatpush1.msra.mxu0 0.0
    %149 = vmatprep.subr.mxu0 0.0
    %150 = vmatpush1.msra.mxu0 0.0
    %151 = vmatprep.subr.mxu0 0.0
    %152 = vmatpush1.msra.mxu0 0.0
    %153 = vmatprep.subr.mxu0 0.0
    %154 = vmatpush1.msra.mxu0 0.0
    %155 = vmatprep.subr.mxu0 0.0
    %156 = vmatpush1.msra.mxu0 0.0
    %157 = vmatprep.subr.mxu0 0.0
    %158 = vmatpush1.msra.mxu0 0.0
    %159 = vmatprep.subr.mxu0 0.0
    %160 = vmatpush1.msra.mxu0 0.0
    %161 = vmatprep.subr.mxu0 0.0
    %162 = vmatpush1.msra.mxu0 0.0
    %163 = vmatprep.subr.mxu0 0.0
    %164 = vmatpush1.msra.mxu0 0.0
    %165 = vmatprep.subr.mxu0 0.0
    %166 = vmatpush1.msra.mxu0 0.0
    %167 = vmatprep.subr.mxu0 0.0
    %168 = vmatpush1.msra.mxu0 0.0
    %169 = vmatprep.subr.mxu0 0.0
    %170 = vmatpush1.msra.mxu0 0.0
    %171 = vmatprep.subr.mxu0 0.0
    %172 = vmatpush1.msra.mxu0 0.0
    %173 = vmatprep.subr.mxu0 0.0
    %174 = vmatpush1.msra.mxu0 0.0
    %175 = vmatprep.subr.mxu0 0.0
    %176 = vmatpush1.msra.mxu0 0.0
    %177 = vmatprep.subr.mxu0 0.0
    %178 = vmatpush1.msra.mxu0 0.0
    %179 = vmatprep.subr.mxu0 0.0
    %180 = vmatpush1.msra.mxu0 0.0
    %181 = vmatprep.subr.mxu0 0.0
    %182 = vmatpush1.msra.mxu0 0.0
    %183 = vmatprep.subr.mxu0 0.0
    %184 = vmatpush1.msra.mxu0 0.0
    %185 = vmatprep.subr.mxu0 0.0
    %186 = vmatpush1.msra.mxu0 0.0
    %187 = vmatprep.subr.mxu0 0.0
    %188 = vmatpush1.msra.mxu0 0.0
    %189 = vmatprep.subr.mxu0 0.0
    %190 = vmatpush1.msra.mxu0 0.0
    %191 = vmatprep.subr.mxu0 0.0
    %192 = vmatpush1.msra.mxu0 0.0
    %193 = vmatprep.subr.mxu0 0.0
    %194 = vmatpush1.msra.mxu0 0.0
    %195 = vmatprep.subr.mxu0 0.0
    %196 = vmatpush1.msra.mxu0 0.0
    %197 = vmatprep.subr.mxu0 0.0
    %198 = vmatpush1.msra.mxu0 0.0
    %199 = vmatprep.subr.mxu0 0.0
    %200 = vmatpush1.msra.mxu0 0.0
    %201 = vmatprep.subr.mxu0 0.0
    %202 = vmatpush1.msra.mxu0 0.0
    %203 = vmatprep.subr.mxu0 0.0
    %204 = vmatpush1.msra.mxu0 0.0
    %205 = vmatprep.subr.mxu0 0.0
    %206 = vmatpush1.msra.mxu0 0.0
    %207 = vmatprep.mubr.f32.mxu0 0.0
    %208 = vmatmul.mubr.f32.gmra.mrb[0].mxu0 %v141
    %v209 = vpop.f32.mrb[0].mxu0
    %v210 = vadd.f32 0.0, %v209
    %v211 = vpop.f32.mrb[0].mxu0
    %212 = vdwg.mxu0
    %v214 = vsel %vm66, %v60, 0
    %216 = vmatprep.subr.mxu0 0.0
    %217 = vmatpush1.msra.mxu0 %v56
    %218 = vmatprep.subr.mxu0 0.0
    %219 = vmatpush1.msra.mxu0 0.0
    %220 = vmatprep.subr.mxu0 0.0
    %221 = vmatpush1.msra.mxu0 0.0
    %222 = vmatprep.subr.mxu0 0.0
    %223 = vmatpush1.msra.mxu0 0.0
    %224 = vmatprep.subr.mxu0 0.0
    %225 = vmatpush1.msra.mxu0 0.0
    %226 = vmatprep.subr.mxu0 0.0
    %227 = vmatpush1.msra.mxu0 0.0
    %228 = vmatprep.subr.mxu0 0.0
    %229 = vmatpush1.msra.mxu0 0.0
    %230 = vmatprep.subr.mxu0 0.0
    %231 = vmatpush1.msra.mxu0 0.0
    %232 = vmatprep.subr.mxu0 0.0
    %233 = vmatpush1.msra.mxu0 0.0
    %234 = vmatprep.subr.mxu0 0.0
    %235 = vmatpush1.msra.mxu0 0.0
    %236 = vmatprep.subr.mxu0 0.0
    %237 = vmatpush1.msra.mxu0 0.0
    %238 = vmatprep.subr.mxu0 0.0
    %239 = vmatpush1.msra.mxu0 0.0
    %240 = vmatprep.subr.mxu0 0.0
    %241 = vmatpush1.msra.mxu0 0.0
    %242 = vmatprep.subr.mxu0 0.0
    %243 = vmatpush1.msra.mxu0 0.0
    %244 = vmatprep.subr.mxu0 0.0
    %245 = vmatpush1.msra.mxu0 0.0
    %246 = vmatprep.subr.mxu0 0.0
    %247 = vmatpush1.msra.mxu0 0.0
    %248 = vmatprep.subr.mxu0 0.0
    %249 = vmatpush1.msra.mxu0 0.0
    %250 = vmatprep.subr.mxu0 0.0
    %251 = vmatpush1.msra.mxu0 0.0
    %252 = vmatprep.subr.mxu0 0.0
    %253 = vmatpush1.msra.mxu0 0.0
    %254 = vmatprep.subr.mxu0 0.0
    %255 = vmatpush1.msra.mxu0 0.0
    %256 = vmatprep.subr.mxu0 0.0
    %257 = vmatpush1.msra.mxu0 0.0
    %258 = vmatprep.subr.mxu0 0.0
    %259 = vmatpush1.msra.mxu0 0.0
    %260 = vmatprep.subr.mxu0 0.0
    %261 = vmatpush1.msra.mxu0 0.0
    %262 = vmatprep.subr.mxu0 0.0
    %263 = vmatpush1.msra.mxu0 0.0
    %264 = vmatprep.subr.mxu0 0.0
    %265 = vmatpush1.msra.mxu0 0.0
    %266 = vmatprep.subr.mxu0 0.0
    %267 = vmatpush1.msra.mxu0 0.0
    %268 = vmatprep.subr.mxu0 0.0
    %269 = vmatpush1.msra.mxu0 0.0
    %270 = vmatprep.subr.mxu0 0.0
    %271 = vmatpush1.msra.mxu0 0.0
    %272 = vmatprep.subr.mxu0 0.0
    %273 = vmatpush1.msra.mxu0 0.0
    %274 = vmatprep.subr.mxu0 0.0
    %275 = vmatpush1.msra.mxu0 0.0
    %276 = vmatprep.subr.mxu0 0.0
    %277 = vmatpush1.msra.mxu0 0.0
    %278 = vmatprep.subr.mxu0 0.0
    %279 = vmatpush1.msra.mxu0 0.0
    %280 = vmatprep.mubr.f32.mxu0 0.0
    %281 = vmatmul.mubr.f32.gmra.mrb[0].mxu0 %v214
    %v282 = vpop.f32.mrb[0].mxu0
    %v283 = vadd.f32 0.0, %v282
    %v284 = vpop.f32.mrb[0].mxu0
    %285 = vdwg.mxu0
    %v287 = vsel %vm66, %v61, 0
    %289 = vmatprep.subr.mxu0 0.0
    %290 = vmatpush1.msra.mxu0 %v57
    %291 = vmatprep.subr.mxu0 0.0
    %292 = vmatpush1.msra.mxu0 0.0
    %293 = vmatprep.subr.mxu0 0.0
    %294 = vmatpush1.msra.mxu0 0.0
    %295 = vmatprep.subr.mxu0 0.0
    %296 = vmatpush1.msra.mxu0 0.0
    %297 = vmatprep.subr.mxu0 0.0
    %298 = vmatpush1.msra.mxu0 0.0
    %299 = vmatprep.subr.mxu0 0.0
    %300 = vmatpush1.msra.mxu0 0.0
    %301 = vmatprep.subr.mxu0 0.0
    %302 = vmatpush1.msra.mxu0 0.0
    %303 = vmatprep.subr.mxu0 0.0
    %304 = vmatpush1.msra.mxu0 0.0
    %305 = vmatprep.subr.mxu0 0.0
    %306 = vmatpush1.msra.mxu0 0.0
    %307 = vmatprep.subr.mxu0 0.0
    %308 = vmatpush1.msra.mxu0 0.0
    %309 = vmatprep.subr.mxu0 0.0
    %310 = vmatpush1.msra.mxu0 0.0
    %311 = vmatprep.subr.mxu0 0.0
    %312 = vmatpush1.msra.mxu0 0.0
    %313 = vmatprep.subr.mxu0 0.0
    %314 = vmatpush1.msra.mxu0 0.0
    %315 = vmatprep.subr.mxu0 0.0
    %316 = vmatpush1.msra.mxu0 0.0
    %317 = vmatprep.subr.mxu0 0.0
    %318 = vmatpush1.msra.mxu0 0.0
    %319 = vmatprep.subr.mxu0 0.0
    %320 = vmatpush1.msra.mxu0 0.0
    %321 = vmatprep.subr.mxu0 0.0
    %322 = vmatpush1.msra.mxu0 0.0
    %323 = vmatprep.subr.mxu0 0.0
    %324 = vmatpush1.msra.mxu0 0.0
    %325 = vmatprep.subr.mxu0 0.0
    %326 = vmatpush1.msra.mxu0 0.0
    %327 = vmatprep.subr.mxu0 0.0
    %328 = vmatpush1.msra.mxu0 0.0
    %329 = vmatprep.subr.mxu0 0.0
    %330 = vmatpush1.msra.mxu0 0.0
    %331 = vmatprep.subr.mxu0 0.0
    %332 = vmatpush1.msra.mxu0 0.0
    %333 = vmatprep.subr.mxu0 0.0
    %334 = vmatpush1.msra.mxu0 0.0
    %335 = vmatprep.subr.mxu0 0.0
    %336 = vmatpush1.msra.mxu0 0.0
    %337 = vmatprep.subr.mxu0 0.0
    %338 = vmatpush1.msra.mxu0 0.0
    %339 = vmatprep.subr.mxu0 0.0
    %340 = vmatpush1.msra.mxu0 0.0
    %341 = vmatprep.subr.mxu0 0.0
    %342 = vmatpush1.msra.mxu0 0.0
    %343 = vmatprep.subr.mxu0 0.0
    %344 = vmatpush1.msra.mxu0 0.0
    %345 = vmatprep.subr.mxu0 0.0
    %346 = vmatpush1.msra.mxu0 0.0
    %347 = vmatprep.subr.mxu0 0.0
    %348 = vmatpush1.msra.mxu0 0.0
    %349 = vmatprep.subr.mxu0 0.0
    %350 = vmatpush1.msra.mxu0 0.0
    %351 = vmatprep.subr.mxu0 0.0
    %352 = vmatpush1.msra.mxu0 0.0
    %353 = vmatprep.mubr.f32.mxu0 0.0
    %354 = vmatmul.mubr.f32.gmra.mrb[0].mxu0 %v287
    %v355 = vpop.f32.mrb[0].mxu0
    %v356 = vadd.f32 0.0, %v355
    %v357 = vpop.f32.mrb[0].mxu0
    %358 = vdwg.mxu0
    %v359 = vadd.f32 %v62, %v137
    %v360 = vadd.f32 %v63, %v210
    %v361 = vadd.f32 %v64, %v283
    %v362 = vadd.f32 %v65, %v356
    %vm363 = vcmask 253952
    %364 = vst.msk [vmem:[#allocation2] sm:$0x1] %vm363, %v359
    %365 = vst.msk [vmem:[#allocation2 + $0x1] sm:$0x1] %vm363, %v360
    %366 = vst.msk [vmem:[#allocation2 + $0x2] sm:$0x1] %vm363, %v361
    %367 = vst.msk [vmem:[#allocation2 + $0x3] sm:$0x1] %vm363, %v362
    %v368 = vld [vmem:[#allocation3] sm:$0x1]
    %v369 = vld [vmem:[#allocation3 + $0x1] sm:$0x1]
    %v370 = vld [vmem:[#allocation3 + $0x2] sm:$0x1]
    %v371 = vld [vmem:[#allocation3 + $0x3] sm:$0x1]
    %vm372 = vcmask 57344
    %v373 = vsel %vm372, %v58, 0.0
    %374 = vadd.xlane.f32.xlu0 %v373
    %v375 = vpop.xlane.xlu0 %374
    %v376 = vsel %vm372, %v59, 0.0
    %377 = vadd.xlane.f32.xlu0 %v376
    %v378 = vpop.xlane.xlu0 %377
    %v379 = vsel %vm372, %v60, 0.0
    %380 = vadd.xlane.f32.xlu0 %v379
    %v381 = vpop.xlane.xlu0 %380
    %v382 = vsel %vm372, %v61, 0.0
    %383 = vadd.xlane.f32.xlu0 %v382
    %v384 = vpop.xlane.xlu0 %383
    %v385 = vadd.f32 %v368, %v375
    %v386 = vadd.f32 %v369, %v378
    %v387 = vadd.f32 %v370, %v381
    %v388 = vadd.f32 %v371, %v384
    %vm389 = vcmask 0
    %390 = vst.msk [vmem:[#allocation3] sm:$0x1] %vm389, %v385
    %391 = vst.msk [vmem:[#allocation3 + $0x1] sm:$0x1] %vm389, %v386
    %392 = vst.msk [vmem:[#allocation3 + $0x2] sm:$0x1] %vm389, %v387
    %393 = vst.msk [vmem:[#allocation3 + $0x3] sm:$0x1] %vm389, %v388
    // Predicated region
    $region22: #{tpu_custom_call.1} parent=1 // pred_check
      %p394 = pneg %p40
    $region23: #{tpu_custom_call.1} parent=1 // pred_check_branch
      %396 = sbr.rel (%p394) target = $region25
    $region24: #{tpu_custom_call.1} parent=1 // pred_region
      %v397 = vld [vmem:[#allocation3] sm:$0x1]
      %v398 = vld [vmem:[#allocation3 + $0x1] sm:$0x1]
      %v399 = vld [vmem:[#allocation3 + $0x2] sm:$0x1]
      %v400 = vld [vmem:[#allocation3 + $0x3] sm:$0x1]
      %v401 = vmax.f32 %v397, 1e-09
      %v402 = vmax.f32 %v398, 1e-09
      %v403 = vmax.f32 %v399, 1e-09
      %v404 = vmax.f32 %v400, 1e-09
      %v405 = vld [vmem:[#allocation2] sm:$0x1]
      %v406 = vld [vmem:[#allocation2 + $0x1] sm:$0x1]
      %v407 = vld [vmem:[#allocation2 + $0x2] sm:$0x1]
      %v408 = vld [vmem:[#allocation2 + $0x3] sm:$0x1]
      %410 = vset.pattern.permute.xlu0 0
      %411 = vperm.xlu0 %410, %v401
      %v412 = vpop.permute.xlu0 %411
      %v414 = vlaneseq
      %v415 = vshrl.u32 %v414, 7
      %v416 = vsub.s32 0, %v415
      %v417 = vrot.slane %v412, %v416
      %419 = vset.pattern.permute.xlu0 0
      %420 = vperm.xlu0 %419, %v402
      %v421 = vpop.permute.xlu0 %420
      %v423 = vlaneseq
      %v424 = vshrl.u32 %v423, 7
      %v425 = vsub.s32 0, %v424
      %v426 = vrot.slane %v421, %v425
      %428 = vset.pattern.permute.xlu0 0
      %429 = vperm.xlu0 %428, %v403
      %v430 = vpop.permute.xlu0 %429
      %v432 = vlaneseq
      %v433 = vshrl.u32 %v432, 7
      %v434 = vsub.s32 0, %v433
      %v435 = vrot.slane %v430, %v434
      %437 = vset.pattern.permute.xlu0 0
      %438 = vperm.xlu0 %437, %v404
      %v439 = vpop.permute.xlu0 %438
      %v441 = vlaneseq
      %v442 = vshrl.u32 %v441, 7
      %v443 = vsub.s32 0, %v442
      %v444 = vrot.slane %v439, %v443
      %v445 = vrcp.pop %v417
      %v446 = vmul.f32 %v405, %v445
      %v447 = vrcp.pop %v426
      %v448 = vmul.f32 %v406, %v447
      %v449 = vrcp.pop %v435
      %v450 = vmul.f32 %v407, %v449
      %v451 = vrcp.pop %v444
      %v452 = vmul.f32 %v408, %v451
      %v453 = vmul.f32 %v446, %v446
      %v454 = vmul.f32 %v448, %v448
      %v455 = vmul.f32 %v450, %v450
      %v456 = vmul.f32 %v452, %v452
      %v457 = vsel %vm363, %v453, 0.0
      %458 = vadd.xlane.f32.xlu0 %v457
      %v459 = vpop.xlane.xlu0 %458
      %v460 = vsel %vm363, %v454, 0.0
      %461 = vadd.xlane.f32.xlu0 %v460
      %v462 = vpop.xlane.xlu0 %461
      %v463 = vsel %vm363, %v455, 0.0
      %464 = vadd.xlane.f32.xlu0 %v463
      %v465 = vpop.xlane.xlu0 %464
      %v466 = vsel %vm363, %v456, 0.0
      %467 = vadd.xlane.f32.xlu0 %v466
      %v468 = vpop.xlane.xlu0 %467
      %v469 = vrsqrt.pop %v459
      %v470 = vmul.f32 %v459, %v469
      %vm471 = vcmp.eq.f32.partialorder %v459, inf
      %v472 = vsel %vm471, %v459, %v470
      %vm473 = vcmp.eq.f32.partialorder %v459, 0.0
      %v474 = vand.u32 %v459, 2147483648
      %v475 = vsel %vm473, %v474, %v472
      %v476 = vrsqrt.pop %v462
      %v477 = vmul.f32 %v462, %v476
      %vm478 = vcmp.eq.f32.partialorder %v462, inf
      %v479 = vsel %vm478, %v462, %v477
      %vm480 = vcmp.eq.f32.partialorder %v462, 0.0
      %v481 = vand.u32 %v462, 2147483648
      %v482 = vsel %vm480, %v481, %v479
      %v483 = vrsqrt.pop %v465
      %v484 = vmul.f32 %v465, %v483
      %vm485 = vcmp.eq.f32.partialorder %v465, inf
      %v486 = vsel %vm485, %v465, %v484
      %vm487 = vcmp.eq.f32.partialorder %v465, 0.0
      %v488 = vand.u32 %v465, 2147483648
      %v489 = vsel %vm487, %v488, %v486
      %v490 = vrsqrt.pop %v468
      %v491 = vmul.f32 %v468, %v490
      %vm492 = vcmp.eq.f32.partialorder %v468, inf
      %v493 = vsel %vm492, %v468, %v491
      %vm494 = vcmp.eq.f32.partialorder %v468, 0.0
      %v495 = vand.u32 %v468, 2147483648
      %v496 = vsel %vm494, %v495, %v493
      %v497 = vmax.f32 %v475, 1e-12
      %v498 = vmax.f32 %v482, 1e-12
      %v499 = vmax.f32 %v489, 1e-12
      %v500 = vmax.f32 %v496, 1e-12
      %v501 = vrcp.pop %v497
      %v502 = vmul.f32 %v446, %v501
      %v503 = vrcp.pop %v498
      %v504 = vmul.f32 %v448, %v503
      %v505 = vrcp.pop %v499
      %v506 = vmul.f32 %v450, %v505
      %v507 = vrcp.pop %v500
      %v508 = vmul.f32 %v452, %v507
      %509 = vst.msk [vmem:[#allocation9] sm:$0x1] %vm363, %v502
      %510 = vst.msk [vmem:[#allocation9 + $0x1] sm:$0x1] %vm363, %v504
      %511 = vst.msk [vmem:[#allocation9 + $0x2] sm:$0x1] %vm363, %v506
      %512 = vst.msk [vmem:[#allocation9 + $0x3] sm:$0x1] %vm363, %v508
    $region25: #{tpu_custom_call.1} parent=1 // pred_fallthru
      _
    // Predicated region
    $region26: #{tpu_custom_call.1} parent=1 // pred_check
      _
    $region27: #{tpu_custom_call.1} parent=1 // pred_check_branch
      %514 = sbr.rel (0) target = $region29
    $region28: #{tpu_custom_call.1} parent=1 // pred_region
      %s516 = ssub.s32 64, 64
      %517 = vsyncadd [#allocation6], %s516
      %s518 = sshll.u32 [#allocation9], 4
      %s519 = int_to_ptr.vmem [resolvable:$true] %s518
      %524 = dma.vmem_to_hbm [thread:$0]  %s519, 64, %s2, [#allocation6], 16, 16, 1
    $region29: #{tpu_custom_call.1} parent=1 // pred_fallthru
      _
    // Predicated region
    $region30: #{tpu_custom_call.1} parent=1 // pred_check
      _
    $region31: #{tpu_custom_call.1} parent=1 // pred_check_branch
      %526 = sbr.rel (0) target = $region33
    $region32: #{tpu_custom_call.1} parent=1 // pred_region
      %527 = dma.done [#allocation6], 64
    $region33: #{tpu_custom_call.1} parent=1 // pred_fallthru
      _
    %528 = vsyncpa [#allocation5], 1
    %529 = vsyncpa [#allocation8], 1
    %530 = vsyncpa [#allocation6], 1

</llo_original>
